<compile_context>
chip_gen: v5e
topology: v5e:2x2
jax: 0.10.0
libtpu: 0.0.40
codegen_flags: <defaults>
</compile_context>

<pallas_src>
import functools

import jax
import jax.numpy as jnp
from jax.experimental import pallas as pl
from jax.experimental.pallas import tpu as pltpu

_MIB = 1024 * 1024


def _mean_pool_kernel(x_ref, o_ref, *, inv_seq_len):
    # x_ref: [tB, tS, H] activation tile (streamed, auto double-buffered).
    # o_ref: [tB, H] f32 output block; constant index over the seq axis, so it is
    #        resident across the reduction and doubles as the accumulator.
    s = pl.program_id(1)

    @pl.when(s == 0)
    def _init():
        o_ref[...] = jnp.zeros_like(o_ref)

    # Widen per-vreg inside the reduction (no materialized f32 copy of the tile).
    o_ref[...] += jnp.sum(x_ref[...], axis=1, dtype=jnp.float32)

    @pl.when(s == pl.num_programs(1) - 1)
    def _finalize():
        o_ref[...] = o_ref[...] * jnp.float32(inv_seq_len)  # sum -> mean


def _vmem_budget():
    """Chip-derived (physical_vmem, vmem_limit_bytes, activation_tile_budget)."""
    try:
        cap = int(getattr(pltpu.get_tpu_info(), "vmem_capacity_bytes", 0) or 0)
    except Exception:
        cap = 0
    if cap <= 0:
        cap = 64 * _MIB  # conservative fallback: v7x per-TensorCore VMEM
    # v5e/v6e (128 MiB phys) -> 48 MiB scoped; v7x (64 MiB phys) -> 48 MiB scoped.
    vmem_limit = min(48 * _MIB, (3 * cap) // 4)
    # 2 pipeline buffers of `tile_budget` + output/accumulator + compiler scratch
    # must fit under vmem_limit -> budget ~ limit/4 (~12 MiB).
    tile_budget = min(12 * _MIB, vmem_limit // 4)
    return cap, vmem_limit, tile_budget


def _pick_tiles(B, S, H, dtype, tile_budget_bytes):
    itemsize = jnp.dtype(dtype).itemsize
    # Sublane packing granularity for the seq (second-to-last) dim of the tile.
    sub = {4: 8, 2: 16, 1: 32}.get(itemsize, 8)

    # Batch tile: multiple of 8 (f32 output sublanes) or full B.  With B >= 16 this
    # gives >= 2 blocks on the "parallel" batch axis (v7x megacore); B <= 8 runs on
    # one core by construction.
    tB = 8 if (B % 8 == 0) else B

    # Seq tile: divisor of S that is a multiple of `sub` (or S itself, always
    # legal); biggest one whose [tB, tS, H] tile fits the budget wins.
    cands = [t for t in range(S, 0, -1) if S % t == 0 and (t % sub == 0 or t == S)]
    tS = cands[-1]  # smallest legal candidate as fallback
    for t in cands:  # descending
        if tB * t * H * itemsize <= tile_budget_bytes:
            tS = t
            break
    return tB, tS


def classification_head(last_hidden_state: jax.Array,
                        weight: jax.Array,
                        bias: jax.Array) -> jax.Array:
    """last_hidden_state: [B, S, H]; weight: [H, 2]; bias: [2] -> logits [B, 2]."""
    B, S, H = last_hidden_state.shape
    dtype = last_hidden_state.dtype
    itemsize = jnp.dtype(dtype).itemsize

    cap, vmem_limit, tile_budget = _vmem_budget()
    tB, tS = _pick_tiles(B, S, H, dtype, tile_budget)

    # Robustness: if the fallback seq tile blew past the budget (e.g. S has no
    # sublane-multiple divisor), raise the scoped limit to cover the real need,
    # capped just under physical VMEM.
    needed = 2 * tB * tS * H * itemsize + 2 * tB * H * 4 + 2 * _MIB
    vmem_limit = min(int(cap * 0.9), max(vmem_limit, needed))

    grid = (B // tB, S // tS)
    kernel = functools.partial(_mean_pool_kernel, inv_seq_len=1.0 / S)

    pooled = pl.pallas_call(
        kernel,
        out_shape=jax.ShapeDtypeStruct((B, H), jnp.float32),
        grid_spec=pltpu.PrefetchScalarGridSpec(
            num_scalar_prefetch=0,
            grid=grid,
            in_specs=[pl.BlockSpec((tB, tS, H), lambda b, s: (b, s, 0))],
            out_specs=pl.BlockSpec((tB, H), lambda b, s: (b, 0)),  # lane-dense, resident
        ),
        compiler_params=pltpu.CompilerParams(
            dimension_semantics=("parallel", "arbitrary"),  # batch ||, seq reduce last
            vmem_limit_bytes=int(vmem_limit),
        ),
        cost_estimate=pl.CostEstimate(
            flops=B * S * H + B * H,
            transcendentals=0,
            bytes_accessed=B * S * H * itemsize + B * H * 4,
        ),
    )(last_hidden_state)

    # Tiny H->2 projection + bias in XLA: keeps the lane-padded weight/bias blocks
    # out of VMEM and is negligible next to the streaming reduction.
    logits = pooled @ weight.astype(jnp.float32) + bias.astype(jnp.float32)
    return logits.astype(dtype)


if __name__ == "__main__":
    # Small shapes consistent with the forward contract:
    #   last_hidden_state: [BATCH_SIZE, SEQ_LENGTH, HIDDEN_SIZE]
    B, S, H = 2, 8, 32
    key = jax.random.PRNGKey(0)
    k_x, k_w, k_b = jax.random.split(key, 3)

    last_hidden_state = jax.random.normal(k_x, (B, S, H), dtype=jnp.float32)
    # Deterministic synthetic parameters (the abstract base class loads none).
    weight = jax.random.normal(k_w, (H, 2), dtype=jnp.float32) * 0.02
    bias = jax.random.normal(k_b, (2,), dtype=jnp.float32) * 0.02

    logits = jax.block_until_ready(
        classification_head(last_hidden_state, weight, bias))

    # Reference check in plain JAX.
    ref = jnp.mean(last_hidden_state, axis=1) @ weight + bias
    assert logits.shape == (B, 2), logits.shape
    assert jnp.allclose(logits, ref, atol=1e-5, rtol=1e-5), (logits, ref)

    print("KERNEL_OK")
</pallas_src>

<mosaic_0001>
module attributes {stable_mosaic.version = 11 : i64} {
  func.func @_mean_pool_kernel(%arg0: i32, %arg1: i32, %arg2: memref<2x8x32xf32, #tpu.memory_space<vmem>>, %arg3: memref<2x32xf32, #tpu.memory_space<vmem>>) attributes {dimension_semantics = [#tpu.dimension_semantics<parallel>, #tpu.dimension_semantics<arbitrary>], iteration_bounds = array<i64: 1, 1>, scalar_prefetch = 0 : i64, scratch_operands = 0 : i64, tpu.core_type = #tpu.core_type<tc>, window_params = [{transform_indices = @transform_0, window_bounds = array<i64: 2, 8, 32>}, {transform_indices = @transform_1, window_bounds = array<i64: 2, 32>}]} {
    %c0_i32 = arith.constant 0 : i32
    %0 = arith.cmpi eq, %arg1, %c0_i32 : i32
    %1 = arith.extui %0 : i1 to i32
    %c0_i32_0 = arith.constant 0 : i32
    %2 = arith.cmpi ne, %1, %c0_i32_0 : i32
    scf.if %2 {
      %cst_9 = arith.constant 0.000000e+00 : f32
      %11 = vector.broadcast %cst_9 : f32 to vector<2x32xf32>
      %c0_10 = arith.constant 0 : index
      %c0_11 = arith.constant 0 : index
      %12 = vector.load %arg3[%c0_10, %c0_11] : memref<2x32xf32, #tpu.memory_space<vmem>>, vector<2x32xf32>
      tpu.vector_store %arg3[%c0_10, %c0_11], %11 {strides = array<i32>} : memref<2x32xf32, #tpu.memory_space<vmem>>, vector<2x32xf32>,
    } else {
    }
    %c0 = arith.constant 0 : index
    %c0_1 = arith.constant 0 : index
    %3 = vector.load %arg3[%c0, %c0_1] : memref<2x32xf32, #tpu.memory_space<vmem>>, vector<2x32xf32>
    %c0_2 = arith.constant 0 : index
    %c0_3 = arith.constant 0 : index
    %c0_4 = arith.constant 0 : index
    %4 = vector.load %arg2[%c0_2, %c0_3, %c0_4] : memref<2x8x32xf32, #tpu.memory_space<vmem>>, vector<2x8x32xf32>
    %cst = arith.constant dense<0.000000e+00> : vector<2x32xf32>
    %5 = vector.multi_reduction <add>, %4, %cst [1] : vector<2x8x32xf32> to vector<2x32xf32>
    %6 = arith.addf %3, %5 : vector<2x32xf32>
    %c0_5 = arith.constant 0 : index
    %c0_6 = arith.constant 0 : index
    %7 = vector.load %arg3[%c0_5, %c0_6] : memref<2x32xf32, #tpu.memory_space<vmem>>, vector<2x32xf32>
    tpu.vector_store %arg3[%c0_5, %c0_6], %6 {strides = array<i32>} : memref<2x32xf32, #tpu.memory_space<vmem>>, vector<2x32xf32>,
    %c0_i32_7 = arith.constant 0 : i32
    %8 = arith.cmpi eq, %arg1, %c0_i32_7 : i32
    %9 = arith.extui %8 : i1 to i32
    %c0_i32_8 = arith.constant 0 : i32
    %10 = arith.cmpi ne, %9, %c0_i32_8 : i32
    scf.if %10 {
      %c0_9 = arith.constant 0 : index
      %c0_10 = arith.constant 0 : index
      %11 = vector.load %arg3[%c0_9, %c0_10] : memref<2x32xf32, #tpu.memory_space<vmem>>, vector<2x32xf32>
      %cst_11 = arith.constant 1.250000e-01 : f32
      %12 = vector.broadcast %cst_11 : f32 to vector<2x32xf32>
      %13 = arith.mulf %11, %12 : vector<2x32xf32>
      %c0_12 = arith.constant 0 : index
      %c0_13 = arith.constant 0 : index
      %14 = vector.load %arg3[%c0_12, %c0_13] : memref<2x32xf32, #tpu.memory_space<vmem>>, vector<2x32xf32>
      tpu.vector_store %arg3[%c0_12, %c0_13], %13 {strides = array<i32>} : memref<2x32xf32, #tpu.memory_space<vmem>>, vector<2x32xf32>,
    } else {
    }
    return
  }
  func.func @transform_0(%arg0: i32, %arg1: i32) -> (i32, i32, i32) {
    %c0_i32 = arith.constant 0 : i32
    %c0_i32_0 = arith.constant 0 : i32
    return %arg0, %arg1, %c0_i32 : i32, i32, i32
  }
  func.func @transform_1(%arg0: i32, %arg1: i32) -> (i32, i32) {
    %c0_i32 = arith.constant 0 : i32
    %c0_i32_0 = arith.constant 0 : i32
    return %arg0, %c0_i32 : i32, i32
  }
}

</mosaic_0001>

<llo_original>
// kernel: tpu_custom_call.1
$region0: #{tpu_custom_call.1}
  #allocation0 [shape = 'u32[]', space=smem, size = 0x4, offset = 0x4, fixed_abs, tag = 'smem constant byte address 0x4 - core index']
  #allocation1 [shape = 'u32[72,128]{1,0:T(1,128)}', space=vmem, size = 0x9000, scoped, tag = 'internal scratch']
  %s0 = inlined_call_operand.hbm [shape: f32[2,8,32], index: 0, kind: input, shape index: {}]
  %s1 = inlined_call_operand.hbm [shape: f32[2,32], index: 1, kind: output, shape index: {}]
  %s2 = sld [smem:[#allocation0]]
  $region26: #{tpu_custom_call.1} parent=0
    _
  %s4 = ssub.s32 1, %s2
  %s5 = scalar_select 0, %s4, %s2
  $region1: #{tpu_custom_call.1} parent=0
    #allocation2 [shape = 'u8[8192]{0}', space=vmem, size = 0x2000, scoped, tag = 'input window, operand 0, single buffered']
    #allocation3 [shape = 's32[1]{0}', space=sflag, size = 0x4, scoped, tag = 'scoped memory for tpu_custom_call.1']
    #allocation4 [shape = 's32[1]{0}', space=sflag, size = 0x4, scoped, tag = 'scoped memory for tpu_custom_call.1']
    #allocation5 [shape = 'u8[1024]{0}', space=vmem, size = 0x400, scoped, tag = 'output window, operand 0, single buffered']
    %6 = vsyncpa [#allocation3], 0
    %7 = vsyncpa [#allocation4], 0
    // Predicated region
    $region2: #{tpu_custom_call.1} parent=1 // pred_check
      _
    $region3: #{tpu_custom_call.1} parent=1 // pred_check_branch
      %9 = sbr.rel (0) target = $region5
    $region4: #{tpu_custom_call.1} parent=1 // pred_region
      %11 = vsyncadd [#allocation3], 0
      %s12 = sshll.u32 %s0, 4
      %s13 = int_to_ptr.hbm [resolvable:$true] %s12
      %s14 = sshll.u32 [#allocation2], 4
      %s15 = int_to_ptr.vmem [resolvable:$true] %s14
      %20 = dma.hbm_to_vmem [thread:$0]  %s13, 256, %s15, [#allocation3], 128, 128, 8
    $region5: #{tpu_custom_call.1} parent=1 // pred_fallthru
      _
    // Predicated region
    $region6: #{tpu_custom_call.1} parent=1 // pred_check
      _
    $region7: #{tpu_custom_call.1} parent=1 // pred_check_branch
      %22 = sbr.rel (0) target = $region9
    $region8: #{tpu_custom_call.1} parent=1 // pred_region
      %24 = dma.done [#allocation3], 256
    $region9: #{tpu_custom_call.1} parent=1 // pred_fallthru
      _
    %p25 = scmp.eq.s32.totalorder 0, 0
    // Predicated region
    $region10: #{tpu_custom_call.1} parent=1 // pred_check
      %p26 = pneg %p25
    $region11: #{tpu_custom_call.1} parent=1 // pred_check_branch
      %28 = sbr.rel (%p26) target = $region13
    $region12: #{tpu_custom_call.1} parent=1 // pred_region
      %vm29 = vcmask 254976
      %30 = vst.msk [vmem:[#allocation5] sm:$0x3] %vm29, 0.0
    $region13: #{tpu_custom_call.1} parent=1 // pred_fallthru
      _
    %v31 = vld [vmem:[#allocation5] sm:$0x3]
    %v32 = vld [vmem:[#allocation2] sm:$0xff]
    %v33 = vld [vmem:[#allocation2 + $0x8] sm:$0xff]
    %vm34 = vcmask 261120
    %v35 = vsel %vm34, %v32, 0.0
    %v36 = vrot.slane %v35, 4
    %v37 = vadd.f32 %v35, %v36
    %v38 = vrot.slane %v37, 2
    %v39 = vadd.f32 %v37, %v38
    %v40 = vrot.slane %v39, 1
    %v41 = vadd.f32 %v39, %v40
    %v42 = vsel %vm34, %v33, 0.0
    %v43 = vrot.slane %v42, 4
    %v44 = vadd.f32 %v42, %v43
    %v45 = vrot.slane %v44, 2
    %v46 = vadd.f32 %v44, %v45
    %v47 = vrot.slane %v46, 1
    %v48 = vadd.f32 %v46, %v47
    %vm51 = vcmask 1041409
    %v52 = vsel %vm51, %v48, %v41
    %v54 = vadd.f32 %v31, %v52
    %vm55 = vcmask 254976
    %56 = vst.msk [vmem:[#allocation5] sm:$0x3] %vm55, %v54
    // Predicated region
    $region14: #{tpu_custom_call.1} parent=1 // pred_check
      %p57 = pneg %p25
    $region15: #{tpu_custom_call.1} parent=1 // pred_check_branch
      %59 = sbr.rel (%p57) target = $region17
    $region16: #{tpu_custom_call.1} parent=1 // pred_region
      %v60 = vld [vmem:[#allocation5] sm:$0x3]
      %v61 = vmul.f32 %v60, 0.125
      %62 = vst.msk [vmem:[#allocation5] sm:$0x3] %vm55, %v61
    $region17: #{tpu_custom_call.1} parent=1 // pred_fallthru
      _
    // Predicated region
    $region18: #{tpu_custom_call.1} parent=1 // pred_check
      _
    $region19: #{tpu_custom_call.1} parent=1 // pred_check_branch
      %64 = sbr.rel (0) target = $region21
    $region20: #{tpu_custom_call.1} parent=1 // pred_region
      %66 = vsyncadd [#allocation4], 0
      %s68 = sshll.u32 [#allocation5], 4
      %s69 = int_to_ptr.vmem [resolvable:$true] %s68
      %s70 = sshll.u32 %s1, 4
      %s71 = int_to_ptr.hbm [resolvable:$true] %s70
      %73 = dma.vmem_to_hbm [thread:$0]  %s69, 32, %s71, [#allocation4]
    $region21: #{tpu_custom_call.1} parent=1 // pred_fallthru
      _
    // Predicated region
    $region22: #{tpu_custom_call.1} parent=1 // pred_check
      _
    $region23: #{tpu_custom_call.1} parent=1 // pred_check_branch
      %75 = sbr.rel (0) target = $region25
    $region24: #{tpu_custom_call.1} parent=1 // pred_region
      %77 = dma.done [#allocation4], 32
    $region25: #{tpu_custom_call.1} parent=1 // pred_fallthru
      _
    %78 = vsyncpa [#allocation3], 1
    %79 = vsyncpa [#allocation4], 1

</llo_original>
